<compile_context>
chip_gen: v5e
topology: v5e:2x2
jax: 0.10.0
libtpu: 0.0.40
codegen_flags: <defaults>
</compile_context>

<pallas_src>
import functools
import math

import jax
import jax.numpy as jnp
from jax.experimental import pallas as pl
from jax.experimental.pallas import tpu as pltpu

NCORES = 2                           # leading grid axis; real sharding only on multi-TC chips
_DBUF_BUDGET = 32 * 1024 * 1024      # bytes for all double-buffered input streams per call

_ARB = getattr(pltpu, "ARBITRARY", "arbitrary")

_VMEM_LIMIT_CACHE = None
_SEM0_CACHE = None


def _round_up(x, m):
    return ((x + m - 1) // m) * m


def _vmem_limit_bytes():
    """Scoped-VMEM limit: ~48 MiB on v7x (64 MiB physical), more on v5e/v6e."""
    global _VMEM_LIMIT_CACHE
    if _VMEM_LIMIT_CACHE is None:
        try:
            cap = int(pltpu.get_tpu_info().vmem_capacity_bytes)
        except Exception:
            cap = 64 * 1024 * 1024
        _VMEM_LIMIT_CACHE = min(max(cap - 16 * 1024 * 1024, 32 * 1024 * 1024),
                                96 * 1024 * 1024)
    return _VMEM_LIMIT_CACHE


def _cparams(sem0):
    return pltpu.CompilerParams(dimension_semantics=(sem0, _ARB),
                                vmem_limit_bytes=_vmem_limit_bytes())


# --------------------------------------------------------------------------
# One-time probe: does CORE_PARALLEL really execute both leading indices and
# write both output blocks on this chip?  (It does on multi-TC v7x; on 1-TC
# v5e/v6e it either fails to compile or is pointless, so we fall back.)
# --------------------------------------------------------------------------
def _probe_kernel(x_ref, o_ref):
    o_ref[...] = x_ref[...] + (pl.program_id(0) + 1).astype(jnp.float32)


def _leading_axis_semantics():
    global _SEM0_CACHE
    if _SEM0_CACHE is not None:
        return _SEM0_CACHE
    sem0 = _ARB
    core_par = getattr(pltpu, "CORE_PARALLEL", None)
    if core_par is not None:
        try:
            x = jnp.zeros((8, 128), jnp.float32)
            out = pl.pallas_call(
                _probe_kernel,
                out_shape=jax.ShapeDtypeStruct((NCORES, 8, 128), jnp.float32),
                grid_spec=pltpu.PrefetchScalarGridSpec(
                    num_scalar_prefetch=0,
                    grid=(NCORES, 1),
                    in_specs=[pl.BlockSpec((8, 128), lambda c, t: (0, 0))],
                    out_specs=pl.BlockSpec((1, 8, 128), lambda c, t: (c, 0, 0))),
                compiler_params=_cparams(core_par),
            )(x)
            out = jax.block_until_ready(out)
            want = jnp.broadcast_to(
                jnp.arange(1, NCORES + 1, dtype=jnp.float32)[:, None, None],
                out.shape)
            if bool(jnp.allclose(out, want)):
                sem0 = core_par
        except Exception:
            sem0 = _ARB
    _SEM0_CACHE = sem0
    return sem0


def _run(call_fn):
    """Run the pallas_call with the probed leading-axis semantics; fall back
    to 'arbitrary' if the CORE_PARALLEL variant fails to compile."""
    global _SEM0_CACHE
    sem0 = _leading_axis_semantics()
    if sem0 is _ARB:
        return call_fn(sem0)
    try:
        return call_fn(sem0)
    except Exception:
        _SEM0_CACHE = _ARB
        return call_fn(_ARB)


# --------------------------------------------------------------------------
# Kernel A: lane-dense flat path (normalized=True, weight=None, total%128==0)
#   per-core partial = sum over this core's tiles of (1/D - pred*target)
#   (its total over valid elements equals sum_rows(1 - dot_row))
# --------------------------------------------------------------------------
def _flat_dot_kernel(pred_ref, targ_ref, o_ref, acc_ref, *,
                     inv_d, tr, nb, tiles_per_core, tail_valid,
                     uniform, fold8):
    ti = pl.program_id(1)
    gt = pl.program_id(0) * tiles_per_core + ti      # unclamped global tile id

    @pl.when(ti == 0)
    def _():
        acc_ref[...] = jnp.zeros_like(acc_ref)

    def contrib(mask_tail):
        # upcast before the multiply: free on a memory-bound kernel, keeps
        # full mantissa for bf16 inputs (v5e has no bf16 VALU anyway).
        p = pred_ref[...].astype(jnp.float32)
        t = targ_ref[...].astype(jnp.float32)
        term = inv_d - p * t                                    # (tr, 128)
        if mask_tail:
            # ragged last tile: mask with *within-tile* element indices and a
            # static valid count, so the index math can never overflow int32.
            rid = jax.lax.broadcasted_iota(jnp.int32, (tr, 128), 0)
            cid = jax.lax.broadcasted_iota(jnp.int32, (tr, 128), 1)
            term = jnp.where(rid * 128 + cid < tail_valid, term, 0.0)
        if fold8:
            # fold into a fixed (8, 128) accumulator: pure VPU vadds
            return term.reshape(tr // 8, 8, 128).sum(axis=0)
        return term.sum(axis=0, keepdims=True)                  # tiny-tr fallback

    ragged = tail_valid != tr * 128

    if uniform:
        # every grid step is a distinct full tile: no masks, no branches
        acc_ref[...] += contrib(False)
    else:
        @pl.when(gt < nb - 1)          # full tiles: unmasked hot path
        def _():
            acc_ref[...] += contrib(False)

        @pl.when(gt == nb - 1)         # last real tile (masked only if ragged)
        def _():
            acc_ref[...] += contrib(ragged)
        # gt >= nb: phantom (clamped) tiles are skipped entirely

    @pl.when(ti == tiles_per_core - 1)
    def _():
        o_ref[0] = jnp.sum(acc_ref[...], keepdims=True)


# --------------------------------------------------------------------------
# Kernel B: row-tiled path (weighted and/or normalized=False, or ragged total)
#   per-core partial = sum over this core's rows of w * (1 - cos_sim)
# --------------------------------------------------------------------------
def _row_kernel(*refs, M, tm, nb, tiles_per_core, normalized, has_weight,
                need_row_mask, skip_phantom, fold8, eps=1e-8):
    if has_weight:
        pred_ref, targ_ref, w_ref, o_ref, acc_ref = refs
    else:
        pred_ref, targ_ref, o_ref, acc_ref = refs

    ti = pl.program_id(1)
    gt = pl.program_id(0) * tiles_per_core + ti

    @pl.when(ti == 0)
    def _():
        acc_ref[...] = jnp.zeros_like(acc_ref)

    def step():
        p = pred_ref[...].astype(jnp.float32)                   # (tm, D)
        t = targ_ref[...].astype(jnp.float32)
        dot = jnp.sum(p * t, axis=-1, keepdims=True)            # (tm, 1)
        if normalized:
            cs = 1.0 - dot
        else:
            # TODO(synk): on v7x, if the three lane reductions saturate the 2
            # XLU units, offload them to the otherwise-idle MXU
            # (x @ ones((D,1))); kept on the XLU here to preserve exact f32.
            pn = jnp.sqrt(jnp.sum(p * p, axis=-1, keepdims=True))
            tn = jnp.sqrt(jnp.sum(t * t, axis=-1, keepdims=True))
            cs = 1.0 - dot / (jnp.maximum(pn, eps) * jnp.maximum(tn, eps))
        if has_weight:
            cs = w_ref[...].astype(jnp.float32) * cs
        if need_row_mask:
            rid = gt * tm + jax.lax.broadcasted_iota(jnp.int32, (tm, 1), 0)
            cs = jnp.where(rid < M, cs, 0.0)
        if fold8:
            acc_ref[...] += cs.reshape(tm // 8, 8, 1).sum(axis=0)   # (8, 1)
        else:
            acc_ref[...] += jnp.sum(cs, keepdims=True)              # (1, 1)

    if skip_phantom:
        pl.when(gt < nb)(step)         # phantom (clamped) tiles skip all work
    else:
        step()

    @pl.when(ti == tiles_per_core - 1)
    def _():
        o_ref[0] = jnp.sum(acc_ref[...], keepdims=True)


# --------------------------------------------------------------------------
# Wrapper
# --------------------------------------------------------------------------
def cosine_similarity_loss(pred, target, weight=None, *, dim=-1,
                           normalized=True, reduction="mean"):
    if reduction not in ("mean", "none", "sum"):
        raise RuntimeError(
            'Unknown reduction type! It should be in ["mean", "none", "sum"]')

    if dim != -1 and dim != pred.ndim - 1:
        # glue: move the reduction axis last (kernel reduces along lanes)
        pred = jnp.moveaxis(pred, dim, -1)
        target = jnp.moveaxis(target, dim, -1)

    lead_shape = pred.shape[:-1]
    D = pred.shape[-1]
    M = int(math.prod(lead_shape)) if lead_shape else 1
    total = M * D
    itemsize = jnp.dtype(pred.dtype).itemsize
    scale = (1.0 / M) if reduction == "mean" else 1.0

    out_spec = pl.BlockSpec((1, 1, 1), lambda c, t: (c, 0, 0))

    # ---------------- Path A: lane-dense flat accumulation ----------------
    if normalized and weight is None and total >= 128 and total % 128 == 0:
        rows = total // 128
        p2 = pred.reshape(rows, 128)      # contiguous reshape: no data movement
        t2 = target.reshape(rows, 128)

        # ~8 MiB per input buffer (amortizes the ~0.35 us/step grid overhead)
        tr_cap = max(8, (_DBUF_BUDGET // (2 * 2 * 128 * itemsize)) // 8 * 8)
        tr = rows if rows <= tr_cap else tr_cap
        fold8 = (tr % 8 == 0)
        nb = pl.cdiv(rows, tr)
        tpc = pl.cdiv(nb, NCORES)
        tail_valid = total - (nb - 1) * tr * 128
        # tiling-consistency asserts (so a future change can't silently break masking)
        assert nb * tr >= rows and (nb - 1) * tr < rows
        assert 0 < tail_valid <= tr * 128
        assert NCORES * tpc >= nb
        uniform = (tail_valid == tr * 128) and (NCORES * tpc == nb)
        idx = lambda c, t: (jnp.minimum(c * tpc + t, nb - 1), 0)

        kernel = functools.partial(
            _flat_dot_kernel, inv_d=1.0 / D, tr=tr, nb=nb, tiles_per_core=tpc,
            tail_valid=tail_valid, uniform=uniform, fold8=fold8)
        acc_shape = (8, 128) if fold8 else (1, 128)

        def call(sem0):
            return pl.pallas_call(
                kernel,
                out_shape=jax.ShapeDtypeStruct((NCORES, 1, 1), jnp.float32),
                grid_spec=pltpu.PrefetchScalarGridSpec(
                    num_scalar_prefetch=0,
                    grid=(NCORES, tpc),
                    in_specs=[pl.BlockSpec((tr, 128), idx),
                              pl.BlockSpec((tr, 128), idx)],
                    out_specs=out_spec,
                    scratch_shapes=[pltpu.VMEM(acc_shape, jnp.float32)]),
                compiler_params=_cparams(sem0),
                cost_estimate=pl.CostEstimate(
                    flops=2 * total, transcendentals=0,
                    bytes_accessed=2 * total * itemsize + NCORES * 4),
            )(p2, t2)

        out = _run(call)
        return jnp.sum(out) * jnp.float32(scale)

    # ---------------- Path B: row-tiled ----------------
    p2 = pred.reshape(M, D)
    t2 = target.reshape(M, D)
    has_weight = weight is not None

    # tile rows so the double-buffered working set stays inside the budget
    # (the minor dim is padded to 128 lanes in VMEM, so account padded bytes)
    padded_d = _round_up(D, 128)
    row_bytes = 2 * padded_d * itemsize + (128 * 4 if has_weight else 0)
    tm_cap = max(8, (_DBUF_BUDGET // (2 * row_bytes)) // 8 * 8)
    tm = M if M <= tm_cap else tm_cap
    fold8 = (tm % 8 == 0)
    nb = pl.cdiv(M, tm)
    tpc = pl.cdiv(nb, NCORES)
    assert nb * tm >= M and (nb - 1) * tm < M
    assert NCORES * tpc >= nb
    need_row_mask = (nb * tm != M)
    skip_phantom = (NCORES * tpc != nb)
    idx = lambda c, t: (jnp.minimum(c * tpc + t, nb - 1), 0)

    in_specs = [pl.BlockSpec((tm, D), idx), pl.BlockSpec((tm, D), idx)]
    args = [p2, t2]
    bytes_accessed = 2 * total * itemsize + NCORES * 4
    if has_weight:
        # TODO(synk): the (tm, 1) weight block is lane-sparse (1/128 lanes);
        # lay weight out as (nb, tm) with a lane-dense (1, tm) block if its
        # strided DMA ever shows up in a profile (traffic is only M*4 bytes).
        w2 = jnp.broadcast_to(weight, lead_shape).reshape(M, 1).astype(jnp.float32)
        in_specs.append(pl.BlockSpec((tm, 1), idx))
        args.append(w2)
        bytes_accessed += M * 4

    kernel = functools.partial(
        _row_kernel, M=M, tm=tm, nb=nb, tiles_per_core=tpc,
        normalized=normalized, has_weight=has_weight,
        need_row_mask=need_row_mask, skip_phantom=skip_phantom, fold8=fold8)
    acc_shape = (8, 1) if fold8 else (1, 1)

    def call(sem0):
        return pl.pallas_call(
            kernel,
            out_shape=jax.ShapeDtypeStruct((NCORES, 1, 1), jnp.float32),
            grid_spec=pltpu.PrefetchScalarGridSpec(
                num_scalar_prefetch=0,
                grid=(NCORES, tpc),
                in_specs=in_specs,
                out_specs=out_spec,
                scratch_shapes=[pltpu.VMEM(acc_shape, jnp.float32)]),
            compiler_params=_cparams(sem0),
            cost_estimate=pl.CostEstimate(
                flops=2 * total + (4 * total if not normalized else 0),
                transcendentals=(2 * M if not normalized else 0),
                bytes_accessed=bytes_accessed),
        )(*args)

    out = _run(call)
    return jnp.sum(out) * jnp.float32(scale)


# --------------------------------------------------------------------------
# Pure-JAX reference (mirrors the PyTorch module)
# --------------------------------------------------------------------------
def _reference(pred, target, weight=None, dim=-1, normalized=True,
               reduction="mean"):
    if normalized:
        cs = 1.0 - jnp.sum(pred * target, axis=dim)
    else:
        eps = 1e-8
        dot = jnp.sum(pred * target, axis=dim)
        pn = jnp.sqrt(jnp.sum(pred * pred, axis=dim))
        tn = jnp.sqrt(jnp.sum(target * target, axis=dim))
        cs = 1.0 - dot / (jnp.maximum(pn, eps) * jnp.maximum(tn, eps))
    if weight is not None:
        cs = weight * cs
    return jnp.mean(cs) if reduction == "mean" else jnp.sum(cs)


if __name__ == "__main__":
    key = jax.random.PRNGKey(0)
    ks = jax.random.split(key, 6)

    cases = []

    # case 1: B=2, C=4, spatial=16, feature dim=16  (M*D multiple of 128)
    s1 = (2, 4, 16, 16)
    p1 = jax.random.normal(ks[0], s1, jnp.float32)
    t1 = jax.random.normal(ks[1], s1, jnp.float32)
    p1 = p1 / jnp.linalg.norm(p1, axis=-1, keepdims=True)
    t1 = t1 / jnp.linalg.norm(t1, axis=-1, keepdims=True)
    w1 = jax.random.uniform(ks[2], s1[:-1], jnp.float32)
    cases.append((p1, t1, w1))

    # case 2: ragged shape (M=21, M*D not a multiple of 128) -> row path + masking
    s2 = (3, 7, 16)
    p2 = jax.random.normal(ks[3], s2, jnp.float32)
    t2 = jax.random.normal(ks[4], s2, jnp.float32)
    p2 = p2 / jnp.linalg.norm(p2, axis=-1, keepdims=True)
    t2 = t2 / jnp.linalg.norm(t2, axis=-1, keepdims=True)
    w2 = jax.random.uniform(ks[5], s2[:-1], jnp.float32)
    cases.append((p2, t2, w2))

    ok = True
    for pred, target, weight in cases:
        for reduction in ("mean", "sum", "none"):
            for normalized in (True, False):
                for w in (None, weight):
                    got = cosine_similarity_loss(
                        pred, target, w, normalized=normalized,
                        reduction=reduction)
                    got = jax.block_until_ready(got)
                    want = _reference(pred, target, w, normalized=normalized,
                                      reduction=reduction)
                    if not jnp.allclose(got, want, rtol=1e-5, atol=1e-5):
                        ok = False
                        print("MISMATCH", pred.shape, reduction, normalized,
                              w is not None, float(got), float(want))

    if ok:
        print("KERNEL_OK")
</pallas_src>

<mosaic_0001>
module attributes {stable_mosaic.version = 11 : i64} {
  func.func @_flat_dot_kernel(%arg0: i32, %arg1: i32, %arg2: memref<16x128xf32, #tpu.memory_space<vmem>>, %arg3: memref<16x128xf32, #tpu.memory_space<vmem>>, %arg4: memref<1x1x1xf32, #tpu.memory_space<vmem>>, %arg5: memref<8x128xf32, #tpu.memory_space<vmem>>) attributes {dimension_semantics = [#tpu.dimension_semantics<arbitrary>, #tpu.dimension_semantics<arbitrary>], iteration_bounds = array<i64: 2, 1>, scalar_prefetch = 0 : i64, scratch_operands = 1 : i64, tpu.core_type = #tpu.core_type<tc>, window_params = [{transform_indices = @transform_0, window_bounds = array<i64: 16, 128>}, {transform_indices = @transform_1, window_bounds = array<i64: 16, 128>}, {transform_indices = @transform_2, window_bounds = array<i64: 1, 1, 1>}]} {
    %c1_i32 = arith.constant 1 : i32
    %0 = arith.muli %arg0, %c1_i32 : i32
    %1 = arith.addi %0, %arg1 : i32
    %c0_i32 = arith.constant 0 : i32
    %2 = arith.cmpi eq, %arg1, %c0_i32 : i32
    %3 = arith.extui %2 : i1 to i32
    %c0_i32_0 = arith.constant 0 : i32
    %4 = arith.cmpi ne, %3, %c0_i32_0 : i32
    scf.if %4 {
      %cst = arith.constant 0.000000e+00 : f32
      %14 = vector.broadcast %cst : f32 to vector<8x128xf32>
      %c0 = arith.constant 0 : index
      %c0_7 = arith.constant 0 : index
      %15 = vector.load %arg5[%c0, %c0_7] : memref<8x128xf32, #tpu.memory_space<vmem>>, vector<8x128xf32>
      tpu.vector_store %arg5[%c0, %c0_7], %14 {strides = array<i32>} : memref<8x128xf32, #tpu.memory_space<vmem>>, vector<8x128xf32>,
    } else {
    }
    %c0_i32_1 = arith.constant 0 : i32
    %5 = arith.cmpi slt, %1, %c0_i32_1 : i32
    %6 = arith.extui %5 : i1 to i32
    %c0_i32_2 = arith.constant 0 : i32
    %7 = arith.cmpi ne, %6, %c0_i32_2 : i32
    scf.if %7 {
      %c0 = arith.constant 0 : index
      %c0_7 = arith.constant 0 : index
      %14 = vector.load %arg5[%c0, %c0_7] : memref<8x128xf32, #tpu.memory_space<vmem>>, vector<8x128xf32>
      %c0_8 = arith.constant 0 : index
      %c0_9 = arith.constant 0 : index
      %15 = vector.load %arg2[%c0_8, %c0_9] : memref<16x128xf32, #tpu.memory_space<vmem>>, vector<16x128xf32>
      %c0_10 = arith.constant 0 : index
      %c0_11 = arith.constant 0 : index
      %16 = vector.load %arg3[%c0_10, %c0_11] : memref<16x128xf32, #tpu.memory_space<vmem>>, vector<16x128xf32>
      %17 = arith.mulf %15, %16 : vector<16x128xf32>
      %cst = arith.constant 6.250000e-02 : f32
      %18 = vector.broadcast %cst : f32 to vector<16x128xf32>
      %19 = arith.subf %18, %17 : vector<16x128xf32>
      %20 = vector.shape_cast %19 : vector<16x128xf32> to vector<2x8x128xf32>
      %cst_12 = arith.constant dense<0.000000e+00> : vector<8x128xf32>
      %21 = vector.multi_reduction <add>, %20, %cst_12 [0] : vector<2x8x128xf32> to vector<8x128xf32>
      %22 = arith.addf %14, %21 : vector<8x128xf32>
      %c0_13 = arith.constant 0 : index
      %c0_14 = arith.constant 0 : index
      %23 = vector.load %arg5[%c0_13, %c0_14] : memref<8x128xf32, #tpu.memory_space<vmem>>, vector<8x128xf32>
      tpu.vector_store %arg5[%c0_13, %c0_14], %22 {strides = array<i32>} : memref<8x128xf32, #tpu.memory_space<vmem>>, vector<8x128xf32>,
    } else {
    }
    %c0_i32_3 = arith.constant 0 : i32
    %8 = arith.cmpi eq, %1, %c0_i32_3 : i32
    %9 = arith.extui %8 : i1 to i32
    %c0_i32_4 = arith.constant 0 : i32
    %10 = arith.cmpi ne, %9, %c0_i32_4 : i32
    scf.if %10 {
      %c0 = arith.constant 0 : index
      %c0_7 = arith.constant 0 : index
      %14 = vector.load %arg5[%c0, %c0_7] : memref<8x128xf32, #tpu.memory_space<vmem>>, vector<8x128xf32>
      %c0_8 = arith.constant 0 : index
      %c0_9 = arith.constant 0 : index
      %15 = vector.load %arg2[%c0_8, %c0_9] : memref<16x128xf32, #tpu.memory_space<vmem>>, vector<16x128xf32>
      %c0_10 = arith.constant 0 : index
      %c0_11 = arith.constant 0 : index
      %16 = vector.load %arg3[%c0_10, %c0_11] : memref<16x128xf32, #tpu.memory_space<vmem>>, vector<16x128xf32>
      %17 = arith.mulf %15, %16 : vector<16x128xf32>
      %cst = arith.constant 6.250000e-02 : f32
      %18 = vector.broadcast %cst : f32 to vector<16x128xf32>
      %19 = arith.subf %18, %17 : vector<16x128xf32>
      %20 = vector.shape_cast %19 : vector<16x128xf32> to vector<2x8x128xf32>
      %cst_12 = arith.constant dense<0.000000e+00> : vector<8x128xf32>
      %21 = vector.multi_reduction <add>, %20, %cst_12 [0] : vector<2x8x128xf32> to vector<8x128xf32>
      %22 = arith.addf %14, %21 : vector<8x128xf32>
      %c0_13 = arith.constant 0 : index
      %c0_14 = arith.constant 0 : index
      %23 = vector.load %arg5[%c0_13, %c0_14] : memref<8x128xf32, #tpu.memory_space<vmem>>, vector<8x128xf32>
      tpu.vector_store %arg5[%c0_13, %c0_14], %22 {strides = array<i32>} : memref<8x128xf32, #tpu.memory_space<vmem>>, vector<8x128xf32>,
    } else {
    }
    %c0_i32_5 = arith.constant 0 : i32
    %11 = arith.cmpi eq, %arg1, %c0_i32_5 : i32
    %12 = arith.extui %11 : i1 to i32
    %c0_i32_6 = arith.constant 0 : i32
    %13 = arith.cmpi ne, %12, %c0_i32_6 : i32
    scf.if %13 {
      %c0 = arith.constant 0 : index
      %c0_7 = arith.constant 0 : index
      %14 = vector.load %arg5[%c0, %c0_7] : memref<8x128xf32, #tpu.memory_space<vmem>>, vector<8x128xf32>
      %15 = vector.shape_cast %14 : vector<8x128xf32> to vector<1x8x128xf32>
      %cst = arith.constant dense<0.000000e+00> : vector<1xf32>
      %16 = vector.multi_reduction <add>, %15, %cst [1, 2] : vector<1x8x128xf32> to vector<1xf32>
      %17 = vector.shape_cast %16 : vector<1xf32> to vector<1x1x1xf32>
      %18 = vector.extract %17[0, 0, 0] : f32 from vector<1x1x1xf32>
      %19 = vector.broadcast %18 : f32 to vector<1x1xf32>
      %c0_8 = arith.constant 0 : index
      %c0_9 = arith.constant 0 : index
      %c0_10 = arith.constant 0 : index
      %20 = vector.load %arg4[%c0_8, %c0_9, %c0_10] : memref<1x1x1xf32, #tpu.memory_space<vmem>>, vector<1x1x1xf32>
      %21 = vector.shape_cast %20 : vector<1x1x1xf32> to vector<1x1xf32>
      %22 = vector.shape_cast %19 : vector<1x1xf32> to vector<1x1x1xf32>
      tpu.vector_store %arg4[%c0_8, %c0_9, %c0_10], %22 {strides = array<i32>} : memref<1x1x1xf32, #tpu.memory_space<vmem>>, vector<1x1x1xf32>,
    } else {
    }
    return
  }
  func.func @transform_0(%arg0: i32, %arg1: i32) -> (i32, i32) {
    %c1_i32 = arith.constant 1 : i32
    %0 = arith.muli %arg0, %c1_i32 : i32
    %1 = arith.addi %0, %arg1 : i32
    %c0_i32 = arith.constant 0 : i32
    %2 = arith.minsi %1, %c0_i32 : i32
    %c0_i32_0 = arith.constant 0 : i32
    %c0_i32_1 = arith.constant 0 : i32
    return %2, %c0_i32_0 : i32, i32
  }
  func.func @transform_1(%arg0: i32, %arg1: i32) -> (i32, i32) {
    %c1_i32 = arith.constant 1 : i32
    %0 = arith.muli %arg0, %c1_i32 : i32
    %1 = arith.addi %0, %arg1 : i32
    %c0_i32 = arith.constant 0 : i32
    %2 = arith.minsi %1, %c0_i32 : i32
    %c0_i32_0 = arith.constant 0 : i32
    %c0_i32_1 = arith.constant 0 : i32
    return %2, %c0_i32_0 : i32, i32
  }
  func.func @transform_2(%arg0: i32, %arg1: i32) -> (i32, i32, i32) {
    %c0_i32 = arith.constant 0 : i32
    %c0_i32_0 = arith.constant 0 : i32
    %c0_i32_1 = arith.constant 0 : i32
    return %arg0, %c0_i32, %c0_i32_0 : i32, i32, i32
  }
}

</mosaic_0001>

<llo_original>
// kernel: tpu_custom_call.1
$region0: #{tpu_custom_call.1}
  #allocation0 [shape = 'u32[]', space=smem, size = 0x4, offset = 0x4, fixed_abs, tag = 'smem constant byte address 0x4 - core index']
  #allocation1 [shape = 'u32[72,128]{1,0:T(1,128)}', space=vmem, size = 0x9000, scoped, tag = 'internal scratch']
  #allocation2 [shape = 'f32[8,128]{1,0:T(8,128)}', space=vmem, size = 0x1000, scoped, tag = 'scratch operand']
  %s0 = inlined_call_operand.hbm [shape: f32[16,128], index: 0, kind: input, shape index: {}]
  %s1 = inlined_call_operand.hbm [shape: f32[16,128], index: 1, kind: input, shape index: {}]
  %s2 = inlined_call_operand.vmem [shape: f32[2,1,1], index: 2, kind: output, shape index: {}]
  %s3 = sld [smem:[#allocation0]]
  $region65: #{tpu_custom_call.1} parent=0
    _
  %s5 = ssub.s32 1, %s3
  %s6 = scalar_select 0, %s5, %s3
  $region1: #{tpu_custom_call.1} parent=0
    #allocation3 [shape = 'u8[16384]{0}', space=vmem, size = 0x4000, scoped, tag = 'input window, operand 0']
    #allocation4 [shape = 's32[2]{0}', space=sflag, size = 0x8, scoped, tag = 'scoped memory for tpu_custom_call.1']
    #allocation5 [shape = 'u8[16384]{0}', space=vmem, size = 0x4000, scoped, tag = 'input window, operand 1']
    #allocation6 [shape = 's32[2]{0}', space=sflag, size = 0x8, scoped, tag = 'scoped memory for tpu_custom_call.1']
    %7 = vsyncpa [#allocation4], 0
    %s8 = scalar_lea.sflag [#allocation4], 1
    %9 = vsyncpa %s8, 0
    %10 = vsyncpa [#allocation6], 0
    %s11 = scalar_lea.sflag [#allocation6], 1
    %12 = vsyncpa %s11, 0
    loop: start=0, step=1, limit=4
    $region2: #{tpu_custom_call.1} parent=1 // loop_pre_header
      _
    $region3: #{tpu_custom_call.1} parent=1 // loop_header
      %s14 = sphi 0, %s18
      %p15 = scmp.ge.s32.totalorder %s14, 4
      %s21 = sphi 0, %s33
      %s22 = sphi 0, %s29
      %s23 = sphi 0, %s21
      %s24 = sphi 0, %s22
      %s25 = sphi 0, %s23
      %s26 = sphi 0, %s24
      %s42 = sphi 0, %s44
      %s45 = sphi 0, %s42
      %s46 = sphi 0, %s45
      %s62 = sphi 0, %s46
      %s74 = sphi 0, %s76
      %s77 = sphi 0, %s74
      %s78 = sphi 0, %s77
      %s94 = sphi 0, %s78
      %s100 = sphi 0, %s102
      %s103 = sphi 0, %s100
      %s104 = sphi 0, %s103
      %s120 = sphi 0, %s104
    $region4: #{tpu_custom_call.1} parent=1 // loop_header_branch
      %17 = sbr.rel (%p15) target = $region8
    $region5: #{tpu_custom_call.1} parent=1 // loop_body
      %s19 = ssub.s32 %s14, 1
      %s20 = ssub.s32 %s14, 2
      %s27 = sadd.s32 1, %s22
      %p28 = scmp.ge.s32.totalorder %s27, 1
      %s29 = scalar_select %p28, 0, %s27
      %s30 = sadd.s32 1, %s21
      %s31 = scalar_select %p28, %s30, %s21
      %p32 = scmp.ge.s32.totalorder %s31, 2
      %s33 = scalar_select %p32, 0, %s31
      %s34 = sadd.s32 %s21, %s22
      %p35 = scmp.lt.s32.totalorder %s34, 0
      %s36 = scalar_select %p35, %s34, 0
      %s37 = sadd.s32 %s33, %s29
      %p38 = scmp.lt.s32.totalorder %s37, 0
      %s39 = scalar_select %p38, %s37, 0
      %s40 = ssub.s32 %s36, %s39
      %p41 = scmp.eq.s32.totalorder %s40, 0
      %s43 = sadd.s32 %s42, 1
      %s44 = scalar_select %p41, %s42, %s43
      %p47 = pneg %p41
      %p48 = scmp.eq.s32.totalorder %s14, 1
      %p49 = por %p47, %p48
      %p50 = scmp.ne.s32.totalorder %s42, %s45
      %p51 = scmp.eq.s32.totalorder %s14, 0
      %p52 = por %p50, %p51
      %p53 = scmp.ne.s32.totalorder %s42, %s45
      %p54 = scmp.eq.s32.totalorder %s19, 1
      %p55 = por %p53, %p54
      %p56 = scmp.ne.s32.totalorder %s45, %s46
      %p57 = scmp.eq.s32.totalorder %s19, 0
      %p58 = por %p56, %p57
      %p59 = scmp.ne.s32.totalorder %s45, %s46
      %p60 = scmp.eq.s32.totalorder %s20, 1
      %p61 = por %p59, %p60
      %p63 = scmp.ne.s32.totalorder %s46, %s62
      %p64 = scmp.eq.s32.totalorder %s20, 0
      %p65 = por %p63, %p64
      %s66 = sadd.s32 %s21, %s22
      %p67 = scmp.lt.s32.totalorder %s66, 0
      %s68 = scalar_select %p67, %s66, 0
      %s69 = sadd.s32 %s33, %s29
      %p70 = scmp.lt.s32.totalorder %s69, 0
      %s71 = scalar_select %p70, %s69, 0
      %s72 = ssub.s32 %s68, %s71
      %p73 = scmp.eq.s32.totalorder %s72, 0
      %s75 = sadd.s32 %s74, 1
      %s76 = scalar_select %p73, %s74, %s75
      %p79 = pneg %p73
      %p80 = scmp.eq.s32.totalorder %s14, 1
      %p81 = por %p79, %p80
      %p82 = scmp.ne.s32.totalorder %s74, %s77
      %p83 = scmp.eq.s32.totalorder %s14, 0
      %p84 = por %p82, %p83
      %p85 = scmp.ne.s32.totalorder %s74, %s77
      %p86 = scmp.eq.s32.totalorder %s19, 1
      %p87 = por %p85, %p86
      %p88 = scmp.ne.s32.totalorder %s77, %s78
      %p89 = scmp.eq.s32.totalorder %s19, 0
      %p90 = por %p88, %p89
      %p91 = scmp.ne.s32.totalorder %s77, %s78
      %p92 = scmp.eq.s32.totalorder %s20, 1
      %p93 = por %p91, %p92
      %p95 = scmp.ne.s32.totalorder %s78, %s94
      %p96 = scmp.eq.s32.totalorder %s20, 0
      %p97 = por %p95, %p96
      %s98 = ssub.s32 %s21, %s33
      %p99 = scmp.eq.s32.totalorder %s98, 0
      %s101 = sadd.s32 %s100, 1
      %s102 = scalar_select %p99, %s100, %s101
      %p105 = pneg %p99
      %p106 = scmp.eq.s32.totalorder %s14, 1
      %p107 = por %p105, %p106
      %p108 = scmp.ne.s32.totalorder %s100, %s103
      %p109 = scmp.eq.s32.totalorder %s14, 0
      %p110 = por %p108, %p109
      %p111 = scmp.ne.s32.totalorder %s100, %s103
      %p112 = scmp.eq.s32.totalorder %s19, 1
      %p113 = por %p111, %p112
      %p114 = scmp.ne.s32.totalorder %s103, %s104
      %p115 = scmp.eq.s32.totalorder %s19, 0
      %p116 = por %p114, %p115
      %p117 = scmp.ne.s32.totalorder %s103, %s104
      %p118 = scmp.eq.s32.totalorder %s20, 1
      %p119 = por %p117, %p118
      %p121 = scmp.ne.s32.totalorder %s104, %s120
      %p122 = scmp.eq.s32.totalorder %s20, 0
      %p123 = por %p121, %p122
      %p124 = scmp.le.s32.totalorder 1, %s14
      %p125 = scmp.lt.s32.totalorder %s14, 3
      %p126 = pnand %p124, %p125
      %p127 = pneg %p126
      // Predicated region
      $region9: #{tpu_custom_call.1} parent=5 // pred_check
        _
      $region10: #{tpu_custom_call.1} parent=5 // pred_check_branch
        %129 = sbr.rel (%p126) target = $region12
      $region11: #{tpu_custom_call.1} parent=5 // pred_region
        %s130 = ssub.s32 %s14, 1
      $region12: #{tpu_custom_call.1} parent=5 // pred_fallthru
        _
      %p131 = scmp.lt.s32.totalorder %s14, 2
      // Predicated region
      $region13: #{tpu_custom_call.1} parent=5 // pred_check
        %p132 = pneg %p131
      $region14: #{tpu_custom_call.1} parent=5 // pred_check_branch
        %134 = sbr.rel (%p132) target = $region16
      $region15: #{tpu_custom_call.1} parent=5 // pred_region
        // Predicated region
        $region17: #{tpu_custom_call.1} parent=15 // pred_check
          %p135 = pneg %p52
        $region18: #{tpu_custom_call.1} parent=15 // pred_check_branch
          %137 = sbr.rel (%p135) target = $region20
        $region19: #{tpu_custom_call.1} parent=15 // pred_region
          %s138 = sand.u32 %s42, 1
          %s139 = scalar_lea.sflag [#allocation4], %s138
          %s140 = sand.u32 %s42, 1
          %s141 = smul.addr %s140, 16
          %s142 = scalar_lea.vmem [#allocation3], %s141
          %s143 = sadd.s32 %s21, %s22
          %p144 = scmp.lt.s32.totalorder %s143, 0
          %s145 = scalar_select %p144, %s143, 0
          %s146 = smul.u32 2, %s145
          %148 = vsyncadd %s139, 0
          %s149 = smul.addr %s146, 8
          %s150 = scalar_lea.hbm %s0, %s149
          %s151 = sshll.u32 %s150, 4
          %s152 = int_to_ptr.hbm [resolvable:$true] %s151
          %s153 = sshll.u32 %s142, 4
          %s154 = int_to_ptr.vmem [resolvable:$true] %s153
          %159 = dma.hbm_to_vmem [thread:$0]  %s152, 256, %s154, %s139, 128, 128, 8
        $region20: #{tpu_custom_call.1} parent=15 // pred_fallthru
          _
        // Predicated region
        $region21: #{tpu_custom_call.1} parent=15 // pred_check
          %p160 = pneg %p84
        $region22: #{tpu_custom_call.1} parent=15 // pred_check_branch
          %162 = sbr.rel (%p160) target = $region24
        $region23: #{tpu_custom_call.1} parent=15 // pred_region
          %s163 = sand.u32 %s74, 1
          %s164 = scalar_lea.sflag [#allocation6], %s163
          %s165 = sand.u32 %s74, 1
          %s166 = smul.addr %s165, 16
          %s167 = scalar_lea.vmem [#allocation5], %s166
          %s168 = sadd.s32 %s21, %s22
          %p169 = scmp.lt.s32.totalorder %s168, 0
          %s170 = scalar_select %p169, %s168, 0
          %s171 = smul.u32 2, %s170
          %173 = vsyncadd %s164, 0
          %s174 = smul.addr %s171, 8
          %s175 = scalar_lea.hbm %s1, %s174
          %s176 = sshll.u32 %s175, 4
          %s177 = int_to_ptr.hbm [resolvable:$true] %s176
          %s178 = sshll.u32 %s167, 4
          %s179 = int_to_ptr.vmem [resolvable:$true] %s178
          %184 = dma.hbm_to_vmem [thread:$0]  %s177, 256, %s179, %s164, 128, 128, 8
        $region24: #{tpu_custom_call.1} parent=15 // pred_fallthru
          _
      $region16: #{tpu_custom_call.1} parent=5 // pred_fallthru
        _
      %p185 = scmp.le.s32.totalorder 1, %s14
      %p186 = scmp.lt.s32.totalorder %s14, 3
      %p187 = pnand %p185, %p186
      %p188 = pneg %p187
      // Predicated region
      $region25: #{tpu_custom_call.1} parent=5 // pred_check
        _
      $region26: #{tpu_custom_call.1} parent=5 // pred_check_branch
        %190 = sbr.rel (%p187) target = $region28
      $region27: #{tpu_custom_call.1} parent=5 // pred_region
        %s191 = ssub.s32 %s14, 1
        %s192 = sand.u32 %s45, 1
        %s193 = scalar_lea.sflag [#allocation4], %s192
        %s194 = sand.u32 %s45, 1
        %s195 = smul.addr %s194, 16
        %s196 = scalar_lea.vmem [#allocation3], %s195
        // Predicated region
        $region29: #{tpu_custom_call.1} parent=27 // pred_check
          %p197 = pneg %p58
        $region30: #{tpu_custom_call.1} parent=27 // pred_check_branch
          %199 = sbr.rel (%p197) target = $region32
        $region31: #{tpu_custom_call.1} parent=27 // pred_region
          %201 = dma.done %s193, 256
        $region32: #{tpu_custom_call.1} parent=27 // pred_fallthru
          _
        %s202 = sand.u32 %s77, 1
        %s203 = scalar_lea.sflag [#allocation6], %s202
        %s204 = sand.u32 %s77, 1
        %s205 = smul.addr %s204, 16
        %s206 = scalar_lea.vmem [#allocation5], %s205
        // Predicated region
        $region33: #{tpu_custom_call.1} parent=27 // pred_check
          %p207 = pneg %p90
        $region34: #{tpu_custom_call.1} parent=27 // pred_check_branch
          %209 = sbr.rel (%p207) target = $region36
        $region35: #{tpu_custom_call.1} parent=27 // pred_region
          %211 = dma.done %s203, 256
        $region36: #{tpu_custom_call.1} parent=27 // pred_fallthru
          _
        %s212 = sand.u32 %s45, 1
        %s213 = scalar_lea.sflag [#allocation4], %s212
        %s214 = sand.u32 %s45, 1
        %s215 = smul.addr %s214, 16
        %s216 = scalar_lea.vmem [#allocation3], %s215
        %p217 = pneg %p58
        %p218 = pneg %p55
        %s219 = sand.u32 %s77, 1
        %s220 = scalar_lea.sflag [#allocation6], %s219
        %s221 = sand.u32 %s77, 1
        %s222 = smul.addr %s221, 16
        %s223 = scalar_lea.vmem [#allocation5], %s222
        %p224 = pneg %p90
        %p225 = pneg %p87
        %p226 = pneg %p116
        %p227 = pneg %p113
        %p228 = scmp.lt.s32.totalorder %s23, 1
        %s229 = scalar_select %p228, %s23, 1
        %s230 = scalar_lea.vmem %s2, %s229
        %s231 = sadd.s32 %s23, %s24
        %p232 = scmp.lt.s32.totalorder %s231, 0
        %s233 = scalar_select %p232, %s231, 0
        %s234 = smul.u32 2, %s233
        %s235 = sadd.s32 %s23, %s24
        %p236 = scmp.lt.s32.totalorder %s235, 0
        %s237 = scalar_select %p236, %s235, 0
        %s238 = smul.u32 2, %s237
        %p239 = scmp.lt.s32.totalorder %s23, 1
        %s240 = scalar_select %p239, %s23, 1
        %s241 = scalar_lea.vmem %s2, %s240
        %s242 = sadd.s32 %s23, %s24
        %p243 = scmp.eq.s32.totalorder %s24, 0
        // Predicated region
        $region37: #{tpu_custom_call.1} parent=27 // pred_check
          %p244 = pneg %p243
        $region38: #{tpu_custom_call.1} parent=27 // pred_check_branch
          %246 = sbr.rel (%p244) target = $region40
        $region39: #{tpu_custom_call.1} parent=27 // pred_region
          %247 = vst [vmem:[#allocation2] sm:$0xff] 0.0
        $region40: #{tpu_custom_call.1} parent=27 // pred_fallthru
          _
        %p248 = scmp.lt.s32.totalorder %s242, 0
        // Predicated region
        $region41: #{tpu_custom_call.1} parent=27 // pred_check
          %p249 = pneg %p248
        $region42: #{tpu_custom_call.1} parent=27 // pred_check_branch
          %251 = sbr.rel (%p249) target = $region44
        $region43: #{tpu_custom_call.1} parent=27 // pred_region
          %v252 = vld [vmem:[#allocation2] sm:$0xff]
          %v253 = vld [vmem:[%s196] sm:$0xff]
          %v254 = vld [vmem:[%s196 + $0x8] sm:$0xff]
          %v255 = vld [vmem:[%s206] sm:$0xff]
          %v256 = vld [vmem:[%s206 + $0x8] sm:$0xff]
          %v257 = vmul.f32 %v253, %v255
          %v258 = vmul.f32 %v254, %v256
          %v259 = vsub.f32 0.0625, %v257
          %v260 = vsub.f32 0.0625, %v258
          %v261 = vadd.f32 %v259, %v260
          %v262 = vadd.f32 %v252, %v261
          %263 = vst [vmem:[#allocation2] sm:$0xff] %v262
        $region44: #{tpu_custom_call.1} parent=27 // pred_fallthru
          _
        %p264 = scmp.eq.s32.totalorder %s242, 0
        // Predicated region
        $region45: #{tpu_custom_call.1} parent=27 // pred_check
          %p265 = pneg %p264
        $region46: #{tpu_custom_call.1} parent=27 // pred_check_branch
          %267 = sbr.rel (%p265) target = $region48
        $region47: #{tpu_custom_call.1} parent=27 // pred_region
          %v268 = vld [vmem:[#allocation2] sm:$0xff]
          %v269 = vld [vmem:[%s196] sm:$0xff]
          %v270 = vld [vmem:[%s196 + $0x8] sm:$0xff]
          %v271 = vld [vmem:[%s206] sm:$0xff]
          %v272 = vld [vmem:[%s206 + $0x8] sm:$0xff]
          %v273 = vmul.f32 %v269, %v271
          %v274 = vmul.f32 %v270, %v272
          %v275 = vsub.f32 0.0625, %v273
          %v276 = vsub.f32 0.0625, %v274
          %v277 = vadd.f32 %v275, %v276
          %v278 = vadd.f32 %v268, %v277
          %279 = vst [vmem:[#allocation2] sm:$0xff] %v278
        $region48: #{tpu_custom_call.1} parent=27 // pred_fallthru
          _
        // Predicated region
        $region49: #{tpu_custom_call.1} parent=27 // pred_check
          %p280 = pneg %p243
        $region50: #{tpu_custom_call.1} parent=27 // pred_check_branch
          %282 = sbr.rel (%p280) target = $region52
        $region51: #{tpu_custom_call.1} parent=27 // pred_region
          %v283 = vld [vmem:[#allocation2] sm:$0xff]
          %284 = vadd.xlane.f32.xlu0 %v283
          %v285 = vpop.xlane.xlu0 %284
          %v286 = vrot.slane %v285, 4
          %v287 = vadd.f32 %v285, %v286
          %v288 = vrot.slane %v287, 2
          %v289 = vadd.f32 %v287, %v288
          %v290 = vrot.slane %v289, 1
          %v291 = vadd.f32 %v289, %v290
          %s292 = vtos %v291
          %v293 = vstv %s292
          %vm294 = vcmask 0
          %295 = vst.msk [vmem:[%s241] sm:$0x1] %vm294, %v293
        $region52: #{tpu_custom_call.1} parent=27 // pred_fallthru
          _
        %p296 = scmp.lt.s32.totalorder %s23, 1
        %s297 = scalar_select %p296, %s23, 1
        %s298 = scalar_lea.vmem %s2, %s297
        // Predicated region
        $region53: #{tpu_custom_call.1} parent=27 // pred_check
          %p299 = pneg %p113
        $region54: #{tpu_custom_call.1} parent=27 // pred_check_branch
          %301 = sbr.rel (%p299) target = $region56
        $region55: #{tpu_custom_call.1} parent=27 // pred_region
          _
        $region56: #{tpu_custom_call.1} parent=27 // pred_fallthru
          _
      $region28: #{tpu_custom_call.1} parent=5 // pred_fallthru
        _
      %p302 = scmp.le.s32.totalorder 2, %s14
      // Predicated region
      $region57: #{tpu_custom_call.1} parent=5 // pred_check
        %p303 = pneg %p302
      $region58: #{tpu_custom_call.1} parent=5 // pred_check_branch
        %305 = sbr.rel (%p303) target = $region60
      $region59: #{tpu_custom_call.1} parent=5 // pred_region
        %s306 = ssub.s32 %s14, 2
        // Predicated region
        $region61: #{tpu_custom_call.1} parent=59 // pred_check
          %p307 = pneg %p119
        $region62: #{tpu_custom_call.1} parent=59 // pred_check_branch
          %309 = sbr.rel (%p307) target = $region64
        $region63: #{tpu_custom_call.1} parent=59 // pred_region
          %p310 = scmp.lt.s32.totalorder %s25, 1
          %s311 = scalar_select %p310, %s25, 1
          %s312 = scalar_lea.vmem %s2, %s311
        $region64: #{tpu_custom_call.1} parent=59 // pred_fallthru
          _
      $region60: #{tpu_custom_call.1} parent=5 // pred_fallthru
        _
    $region6: #{tpu_custom_call.1} parent=1 // loop_footer
      %s18 = sadd.s32 1, %s14
    $region7: #{tpu_custom_call.1} parent=1 // loop_footer_branch
      %13 = sbr.rel target = $region3
    $region8: #{tpu_custom_call.1} parent=1 // loop_exit
      _
    %313 = vsyncpa [#allocation4], 1
    %s314 = scalar_lea.sflag [#allocation4], 1
    %315 = vsyncpa %s314, 1
    %316 = vsyncpa [#allocation6], 1
    %s317 = scalar_lea.sflag [#allocation6], 1
    %318 = vsyncpa %s317, 1

</llo_original>
